<compile_context>
chip_gen: v7x
topology: tpu7x:2x2x1
jax: 0.10.0
libtpu: 0.0.40
codegen_flags: <defaults>
</compile_context>

<pallas_src>
import functools

import jax
import jax.numpy as jnp
from jax.experimental import pallas as pl
from jax.experimental.pallas import tpu as pltpu


_TILE_VMEM_BUDGET = 32 * 1024 * 1024   # bytes of double-buffered tiles we allow
_VMEM_LIMIT_BYTES = 40 * 1024 * 1024   # explicit scoped-VMEM limit (ok on v5e..v7x)


def _disc_kernel(x_ref, w1_ref, b1_ref, w2_ref, b2_ref, o_ref, h_acc):
    """Grid: (batch blocks [parallel], K reduction blocks [arbitrary])."""
    k = pl.program_id(1)

    @pl.when(k == 0)
    def _():
        h_acc[...] = jnp.zeros_like(h_acc)

    # First Linear: partial contraction over this K tile.
    # x tile arrives f32 from HBM; cast to bf16 on the VPU (free, HBM-bound
    # kernel) and accumulate in f32 on the MXU.
    h_acc[...] += jnp.dot(
        x_ref[...].astype(jnp.bfloat16),
        w1_ref[...],
        preferred_element_type=jnp.float32,
    )

    @pl.when(k == pl.num_programs(1) - 1)
    def _():
        h = h_acc[...] + b1_ref[...]                      # bias broadcast (1, H1)
        h = jnp.where(h >= 0.0, h, 0.1 * h)               # LeakyReLU(0.1)
        # Second Linear (128 -> 1): VPU multiply + lane reduction instead of an
        # N=1 f32 MXU matmul (avoids an MXU result-FIFO drain at the tail).
        logit = jnp.sum(h * w2_ref[...], axis=-1, keepdims=True) + b2_ref[...]
        o_ref[...] = jax.nn.sigmoid(logit).astype(o_ref.dtype)   # Sigmoid


def _round_up(x, m):
    return (x + m - 1) // m * m


def _pick_tk(f128, bm, tk_max):
    """Largest tk (multiple of 128) that divides f128 and fits the VMEM budget.

    Budget counts the double-buffered x tile (f32) + w1 tile (bf16) + the f32
    accumulator.  Because tk divides f128, no K padding of x/w1 is needed.
    """
    per_tk = 2 * (bm * 4 + 128 * 2)          # bytes per unit of tk (x + w1, 2 bufs)
    fixed = bm * 128 * 4                      # accumulator
    cap = max(128, (min(tk_max, f128) // 128) * 128)
    tk = cap
    while tk > 128 and (f128 % tk != 0 or fixed + per_tk * tk > _TILE_VMEM_BUDGET):
        tk -= 128
    return tk


@functools.partial(jax.jit, static_argnames=("tk_max",))
def discriminator_forward(x, w1, b1, w2, b2, *, tk_max=18816):
    """x: (B, F) float32.  w1: (F, 128) bfloat16 (cache the cast!).  Returns (B, 1) f32.

    w1 should be passed as a persistently cached bf16 copy of the f32 weight; a
    defensive cast is applied here only if the caller forgot.
    """
    B, F = x.shape
    H1 = w1.shape[1]

    if w1.dtype != jnp.bfloat16:
        # Callers should cache a bf16 copy at init / param update; this fallback
        # costs an extra HBM round trip of w1 every call.
        w1 = w1.astype(jnp.bfloat16)
    b1 = b1.astype(jnp.float32)
    w2 = w2.astype(jnp.float32)
    b2 = b2.astype(jnp.float32)

    # Batch tiling: one block for typical batches (w1 streamed from HBM exactly
    # once); 256-row blocks for very large batches.  Multiple of 16 sublanes.
    if B <= 512:
        bm = _round_up(B, 16)
    else:
        bm = 256
    B_pad = _round_up(B, bm)

    # K tiling: tk divides F128, so the only K padding ever needed is the ragged
    # <=127 columns when F itself is not a multiple of 128 (it is for the real
    # 150528-feature model and the demo's 768).
    F128 = _round_up(F, 128)
    tk = _pick_tk(F128, bm, tk_max)

    if B_pad != B or F128 != F:
        x = jnp.pad(x, ((0, B_pad - B), (0, F128 - F)))
    if F128 != F:
        w1 = jnp.pad(w1, ((0, F128 - F), (0, 0)))

    grid = (B_pad // bm, F128 // tk)

    cost = pl.CostEstimate(
        flops=2 * B_pad * F128 * H1 + 3 * B_pad * H1,
        transcendentals=B_pad,
        bytes_accessed=B_pad * F128 * 4 + F128 * H1 * 2 + B_pad * 4,
    )

    out = pl.pallas_call(
        _disc_kernel,
        out_shape=jax.ShapeDtypeStruct((B_pad, 1), jnp.float32),
        grid_spec=pltpu.PrefetchScalarGridSpec(
            num_scalar_prefetch=0,
            grid=grid,
            in_specs=[
                pl.BlockSpec((bm, tk), lambda i, k: (i, k)),    # x tile (f32)
                pl.BlockSpec((tk, H1), lambda i, k: (k, 0)),    # w1 tile (bf16)
                pl.BlockSpec((1, H1), lambda i, k: (0, 0)),     # b1 (f32)
                pl.BlockSpec((1, H1), lambda i, k: (0, 0)),     # w2 row (f32)
                pl.BlockSpec((1, 1), lambda i, k: (0, 0)),      # b2 (f32)
            ],
            out_specs=pl.BlockSpec((bm, 1), lambda i, k: (i, 0)),
            scratch_shapes=[pltpu.VMEM((bm, H1), jnp.float32)],
        ),
        compiler_params=pltpu.CompilerParams(
            # batch axis -> parallel (megacore sharding on v7x); K -> reduction.
            dimension_semantics=("parallel", "arbitrary"),
            vmem_limit_bytes=_VMEM_LIMIT_BYTES,
        ),
        cost_estimate=cost,
    )(x, w1, b1, w2, b2)

    return out[:B]


def init_params(key, in_features, hidden, out_features):
    """PyTorch-style Linear init: U(-1/sqrt(fan_in), 1/sqrt(fan_in)).

    w1 is stored transposed vs. torch as (in, hidden); w2 is (out, hidden),
    which is exactly torch's second-layer weight layout.
    """
    k1, k2, k3, k4 = jax.random.split(key, 4)
    bound1 = 1.0 / jnp.sqrt(in_features)
    bound2 = 1.0 / jnp.sqrt(hidden)
    w1 = jax.random.uniform(k1, (in_features, hidden), jnp.float32, -bound1, bound1)
    b1 = jax.random.uniform(k2, (1, hidden), jnp.float32, -bound1, bound1)
    w2 = jax.random.uniform(k3, (out_features, hidden), jnp.float32, -bound2, bound2)
    b2 = jax.random.uniform(k4, (1, out_features), jnp.float32, -bound2, bound2)
    return w1, b1, w2, b2


def reference_forward(x, w1, b1, w2, b2):
    h = x @ w1 + b1
    h = jnp.where(h >= 0.0, h, 0.1 * h)
    return jax.nn.sigmoid(h @ w2.T + b2)


if __name__ == "__main__":
    # Small shapes consistent with the module's forward: a flattened NCHW image
    # (B, C*H*W) -> 128 -> 1.  (Full model uses C*H*W = 3*224*224; here 3*16*16.)
    B, C, H, W = 2, 3, 16, 16
    IN_FEATURES = C * H * W          # 768
    HIDDEN = 128
    OUT_FEATURES = 1

    key = jax.random.PRNGKey(0)
    kx, kp = jax.random.split(key)
    img = jax.random.normal(kx, (B, C, H, W), jnp.float32)   # NCHW like torch
    x = img.reshape(B, IN_FEATURES)                          # flatten for nn.Linear

    w1, b1, w2, b2 = init_params(kp, IN_FEATURES, HIDDEN, OUT_FEATURES)
    # Cache the bf16 copy of the big weight once (what a real caller would do).
    w1_bf16 = w1.astype(jnp.bfloat16)

    # Reference on the same bf16-rounded operands (kernel streams/casts to bf16,
    # accumulates f32), plus a looser check against the pure f32 reference.
    x_c = x.astype(jnp.bfloat16).astype(jnp.float32)
    w1_c = w1_bf16.astype(jnp.float32)
    ref_bf16 = reference_forward(x_c, w1_c, b1, w2, b2)
    ref_f32 = reference_forward(x, w1, b1, w2, b2)

    # 1) Default config: whole 768-wide K fits one tile -> single-step grid.
    out = discriminator_forward(x, w1_bf16, b1, w2, b2)
    out = jax.block_until_ready(out)
    assert out.shape == (B, OUT_FEATURES)
    assert jnp.allclose(out, ref_bf16, atol=5e-4, rtol=5e-4), (out, ref_bf16)
    assert jnp.allclose(out, ref_f32, atol=2e-2, rtol=2e-2), (out, ref_f32)

    # 2) Small tk forces a multi-step K reduction (exercises the accumulator path
    #    used by the full 150528-feature model).
    out2 = discriminator_forward(x, w1_bf16, b1, w2, b2, tk_max=256)
    out2 = jax.block_until_ready(out2)
    assert out2.shape == (B, OUT_FEATURES)
    assert jnp.allclose(out2, ref_bf16, atol=5e-4, rtol=5e-4), (out2, ref_bf16)
    assert jnp.allclose(out2, ref_f32, atol=2e-2, rtol=2e-2), (out2, ref_f32)

    print("KERNEL_OK")
</pallas_src>

<mosaic_0001>
module attributes {stable_mosaic.version = 11 : i64} {
  func.func @_disc_kernel(%arg0: i32, %arg1: i32, %arg2: memref<16x768xf32, #tpu.memory_space<vmem>>, %arg3: memref<768x128xbf16, #tpu.memory_space<vmem>>, %arg4: memref<1x128xf32, #tpu.memory_space<vmem>>, %arg5: memref<1x128xf32, #tpu.memory_space<vmem>>, %arg6: memref<1x1xf32, #tpu.memory_space<vmem>>, %arg7: memref<16x1xf32, #tpu.memory_space<vmem>>, %arg8: memref<16x128xf32, #tpu.memory_space<vmem>>) attributes {dimension_semantics = [#tpu.dimension_semantics<parallel>, #tpu.dimension_semantics<arbitrary>], iteration_bounds = array<i64: 1, 1>, scalar_prefetch = 0 : i64, scratch_operands = 1 : i64, tpu.core_type = #tpu.core_type<tc>, window_params = [{transform_indices = @transform_0, window_bounds = array<i64: 16, 768>}, {transform_indices = @transform_1, window_bounds = array<i64: 768, 128>}, {pipeline_mode = #tpu.pipeline_mode<synchronous>, transform_indices = @transform_2, window_bounds = array<i64: 1, 128>}, {pipeline_mode = #tpu.pipeline_mode<synchronous>, transform_indices = @transform_3, window_bounds = array<i64: 1, 128>}, {pipeline_mode = #tpu.pipeline_mode<synchronous>, transform_indices = @transform_4, window_bounds = array<i64: 1, 1>}, {transform_indices = @transform_5, window_bounds = array<i64: 16, 1>}]} {
    %c0_i32 = arith.constant 0 : i32
    %0 = arith.cmpi eq, %arg1, %c0_i32 : i32
    %1 = arith.extui %0 : i1 to i32
    %c0_i32_0 = arith.constant 0 : i32
    %2 = arith.cmpi ne, %1, %c0_i32_0 : i32
    scf.if %2 {
      %cst_10 = arith.constant 0.000000e+00 : f32
      %13 = vector.broadcast %cst_10 : f32 to vector<16x128xf32>
      %c0_11 = arith.constant 0 : index
      %c0_12 = arith.constant 0 : index
      %14 = vector.load %arg8[%c0_11, %c0_12] : memref<16x128xf32, #tpu.memory_space<vmem>>, vector<16x128xf32>
      tpu.vector_store %arg8[%c0_11, %c0_12], %13 {strides = array<i32>} : memref<16x128xf32, #tpu.memory_space<vmem>>, vector<16x128xf32>,
    } else {
    }
    %c0 = arith.constant 0 : index
    %c0_1 = arith.constant 0 : index
    %3 = vector.load %arg8[%c0, %c0_1] : memref<16x128xf32, #tpu.memory_space<vmem>>, vector<16x128xf32>
    %c0_2 = arith.constant 0 : index
    %c0_3 = arith.constant 0 : index
    %4 = vector.load %arg2[%c0_2, %c0_3] : memref<16x768xf32, #tpu.memory_space<vmem>>, vector<16x768xf32>
    %5 = arith.truncf %4 : vector<16x768xf32> to vector<16x768xbf16>
    %c0_4 = arith.constant 0 : index
    %c0_5 = arith.constant 0 : index
    %6 = vector.load %arg3[%c0_4, %c0_5] : memref<768x128xbf16, #tpu.memory_space<vmem>>, vector<768x128xbf16>
    %cst = arith.constant dense<0.000000e+00> : vector<16x128xf32>
    %7 = tpu.matmul %5, %6, %cst {dimension_numbers = #tpu.dot_dimension_numbers<[1], [0], [0], [1], [0, 0, 1, 1], [], []>} : vector<16x768xbf16>, vector<768x128xbf16>, vector<16x128xf32> -> vector<16x128xf32>
    %8 = arith.addf %3, %7 : vector<16x128xf32>
    %c0_6 = arith.constant 0 : index
    %c0_7 = arith.constant 0 : index
    %9 = vector.load %arg8[%c0_6, %c0_7] : memref<16x128xf32, #tpu.memory_space<vmem>>, vector<16x128xf32>
    tpu.vector_store %arg8[%c0_6, %c0_7], %8 {strides = array<i32>} : memref<16x128xf32, #tpu.memory_space<vmem>>, vector<16x128xf32>,
    %c0_i32_8 = arith.constant 0 : i32
    %10 = arith.cmpi eq, %arg1, %c0_i32_8 : i32
    %11 = arith.extui %10 : i1 to i32
    %c0_i32_9 = arith.constant 0 : i32
    %12 = arith.cmpi ne, %11, %c0_i32_9 : i32
    scf.if %12 {
      %c0_10 = arith.constant 0 : index
      %c0_11 = arith.constant 0 : index
      %13 = vector.load %arg8[%c0_10, %c0_11] : memref<16x128xf32, #tpu.memory_space<vmem>>, vector<16x128xf32>
      %c0_12 = arith.constant 0 : index
      %c0_13 = arith.constant 0 : index
      %14 = vector.load %arg4[%c0_12, %c0_13] : memref<1x128xf32, #tpu.memory_space<vmem>>, vector<1x128xf32>
      %15 = vector.broadcast %14 : vector<1x128xf32> to vector<16x128xf32>
      %16 = arith.addf %13, %15 : vector<16x128xf32>
      %cst_14 = arith.constant 0.000000e+00 : f32
      %17 = vector.broadcast %cst_14 : f32 to vector<16x128xf32>
      %18 = arith.cmpf oge, %16, %17 : vector<16x128xf32>
      %cst_15 = arith.constant 1.000000e-01 : f32
      %19 = vector.broadcast %cst_15 : f32 to vector<16x128xf32>
      %20 = arith.mulf %19, %16 : vector<16x128xf32>
      %21 = arith.select %18, %16, %20 : vector<16x128xi1>, vector<16x128xf32>
      %c0_16 = arith.constant 0 : index
      %c0_17 = arith.constant 0 : index
      %22 = vector.load %arg5[%c0_16, %c0_17] : memref<1x128xf32, #tpu.memory_space<vmem>>, vector<1x128xf32>
      %23 = vector.broadcast %22 : vector<1x128xf32> to vector<16x128xf32>
      %24 = arith.mulf %21, %23 : vector<16x128xf32>
      %cst_18 = arith.constant dense<0.000000e+00> : vector<16xf32>
      %25 = vector.multi_reduction <add>, %24, %cst_18 [1] : vector<16x128xf32> to vector<16xf32>
      %26 = vector.shape_cast %25 : vector<16xf32> to vector<16x1xf32>
      %c0_19 = arith.constant 0 : index
      %c0_20 = arith.constant 0 : index
      %27 = vector.load %arg6[%c0_19, %c0_20] : memref<1x1xf32, #tpu.memory_space<vmem>>, vector<1x1xf32>
      %28 = vector.broadcast %27 : vector<1x1xf32> to vector<16x1xf32>
      %29 = arith.addf %26, %28 : vector<16x1xf32>
      %30 = arith.negf %29 : vector<16x1xf32>
      %31 = math.exp %30 : vector<16x1xf32>
      %cst_21 = arith.constant 1.000000e+00 : f32
      %32 = vector.broadcast %cst_21 : f32 to vector<16x1xf32>
      %33 = arith.addf %32, %31 : vector<16x1xf32>
      %34 = arith.divf %32, %33 : vector<16x1xf32>
      %c0_22 = arith.constant 0 : index
      %c0_23 = arith.constant 0 : index
      %35 = vector.load %arg7[%c0_22, %c0_23] : memref<16x1xf32, #tpu.memory_space<vmem>>, vector<16x1xf32>
      tpu.vector_store %arg7[%c0_22, %c0_23], %34 {strides = array<i32>} : memref<16x1xf32, #tpu.memory_space<vmem>>, vector<16x1xf32>,
    } else {
    }
    return
  }
  func.func @transform_0(%arg0: i32, %arg1: i32) -> (i32, i32) {
    %c0_i32 = arith.constant 0 : i32
    return %arg0, %arg1 : i32, i32
  }
  func.func @transform_1(%arg0: i32, %arg1: i32) -> (i32, i32) {
    %c0_i32 = arith.constant 0 : i32
    %c0_i32_0 = arith.constant 0 : i32
    return %arg1, %c0_i32 : i32, i32
  }
  func.func @transform_2(%arg0: i32, %arg1: i32) -> (i32, i32) {
    %c0_i32 = arith.constant 0 : i32
    %c0_i32_0 = arith.constant 0 : i32
    %c0_i32_1 = arith.constant 0 : i32
    return %c0_i32, %c0_i32_0 : i32, i32
  }
  func.func @transform_3(%arg0: i32, %arg1: i32) -> (i32, i32) {
    %c0_i32 = arith.constant 0 : i32
    %c0_i32_0 = arith.constant 0 : i32
    %c0_i32_1 = arith.constant 0 : i32
    return %c0_i32, %c0_i32_0 : i32, i32
  }
  func.func @transform_4(%arg0: i32, %arg1: i32) -> (i32, i32) {
    %c0_i32 = arith.constant 0 : i32
    %c0_i32_0 = arith.constant 0 : i32
    %c0_i32_1 = arith.constant 0 : i32
    return %c0_i32, %c0_i32_0 : i32, i32
  }
  func.func @transform_5(%arg0: i32, %arg1: i32) -> (i32, i32) {
    %c0_i32 = arith.constant 0 : i32
    %c0_i32_0 = arith.constant 0 : i32
    return %arg0, %c0_i32 : i32, i32
  }
}

</mosaic_0001>

<llo_original>
// kernel: discriminator_forward.1
$region0: #{discriminator_forward.1}
  #allocation0 [shape = 'u32[]', space=smem, size = 0x4, offset = 0x4, fixed_abs, tag = 'smem constant byte address 0x4 - core index']
  #allocation1 [shape = 'u32[144,128]{1,0:T(1,128)}', space=vmem, size = 0x12000, scoped, tag = 'internal scratch']
  #allocation2 [shape = 'f32[16,128]{1,0:T(8,128)}', space=vmem, size = 0x2000, scoped, tag = 'scratch operand']
  #allocation3 [shape = 'f32[1,1]{1,0:T(1,128)S(1)}', space=vmem, size = 0x200, scoped, tag = 'scoped memory for discriminator_forward.1']
  %s0 = inlined_call_operand.vmem [shape: f32[16,768], index: 0, kind: input, shape index: {}]
  %s1 = inlined_call_operand.hbm [shape: bf16[768,128], index: 1, kind: input, shape index: {}]
  %s2 = inlined_call_operand.vmem [shape: f32[1,128], index: 2, kind: input, shape index: {}]
  %s3 = inlined_call_operand.vmem [shape: f32[1,128], index: 3, kind: input, shape index: {}]
  %s4 = inlined_call_operand.<no memory space> [shape: f32[1,1], index: 4, kind: input, shape index: {}]
  %s5 = inlined_call_operand.vmem [shape: f32[16,1], index: 5, kind: output, shape index: {}]
  %s6 = sld [smem:[#allocation0]]
  $region42: #{discriminator_forward.1} parent=0
    _
  %s8 = ssub.s32 1, %s6
  %s9 = scalar_select 0, %s8, %s6
  %v10 = vstv %s4
  %11 = vst [vmem:[#allocation3] sm:$0x1] %v10
  $region1: #{discriminator_forward.1} parent=0
    #allocation4 [shape = 'u8[196608]{0}', space=vmem, size = 0x30000, scoped, tag = 'input window, operand 1, single buffered']
    #allocation5 [shape = 's32[1]{0}', space=sflag, size = 0x4, scoped, tag = 'scoped memory for discriminator_forward.1']
    %12 = vsyncpa [#allocation5], 0
    // Predicated region
    $region2: #{discriminator_forward.1} parent=1 // pred_check
      _
    $region3: #{discriminator_forward.1} parent=1 // pred_check_branch
      %14 = sbr.rel (0) target = $region5
    $region4: #{discriminator_forward.1} parent=1 // pred_region
      _
    $region5: #{discriminator_forward.1} parent=1 // pred_fallthru
      _
    // Predicated region
    $region6: #{discriminator_forward.1} parent=1 // pred_check
      _
    $region7: #{discriminator_forward.1} parent=1 // pred_check_branch
      %16 = sbr.rel (0) target = $region9
    $region8: #{discriminator_forward.1} parent=1 // pred_region
      %s18 = ssub.s32 6144, 6144
      %19 = vsyncadd [#allocation5], %s18
      %s20 = sshll.u32 [#allocation4], 4
      %s21 = int_to_ptr.vmem [resolvable:$true] %s20
      %26 = dma.hbm_to_vmem [thread:$0]  %s1, 6144, %s21, [#allocation5], 64, 64, 4
    $region9: #{discriminator_forward.1} parent=1 // pred_fallthru
      _
    // Predicated region
    $region10: #{discriminator_forward.1} parent=1 // pred_check
      _
    $region11: #{discriminator_forward.1} parent=1 // pred_check_branch
      %28 = sbr.rel (0) target = $region13
    $region12: #{discriminator_forward.1} parent=1 // pred_region
      _
    $region13: #{discriminator_forward.1} parent=1 // pred_fallthru
      _
    // Predicated region
    $region14: #{discriminator_forward.1} parent=1 // pred_check
      _
    $region15: #{discriminator_forward.1} parent=1 // pred_check_branch
      %30 = sbr.rel (0) target = $region17
    $region16: #{discriminator_forward.1} parent=1 // pred_region
      _
    $region17: #{discriminator_forward.1} parent=1 // pred_fallthru
      _
    // Predicated region
    $region18: #{discriminator_forward.1} parent=1 // pred_check
      _
    $region19: #{discriminator_forward.1} parent=1 // pred_check_branch
      %32 = sbr.rel (0) target = $region21
    $region20: #{discriminator_forward.1} parent=1 // pred_region
      _
    $region21: #{discriminator_forward.1} parent=1 // pred_fallthru
      _
    // Predicated region
    $region22: #{discriminator_forward.1} parent=1 // pred_check
      _
    $region23: #{discriminator_forward.1} parent=1 // pred_check_branch
      %34 = sbr.rel (0) target = $region25
    $region24: #{discriminator_forward.1} parent=1 // pred_region
      %35 = dma.done [#allocation5], 6144
    $region25: #{discriminator_forward.1} parent=1 // pred_fallthru
      _
    %p37 = scmp.eq.s32.totalorder 0, 0
    // Predicated region
    $region26: #{discriminator_forward.1} parent=1 // pred_check
      %p38 = pneg %p37
    $region27: #{discriminator_forward.1} parent=1 // pred_check_branch
      %40 = sbr.rel (%p38) target = $region29
    $region28: #{discriminator_forward.1} parent=1 // pred_region
      %41 = vst [vmem:[#allocation2] sm:$0xff] 0.0
      %42 = vst [vmem:[#allocation2 + $0x8] sm:$0xff] 0.0
    $region29: #{discriminator_forward.1} parent=1 // pred_fallthru
      _
    %v43 = vld [vmem:[#allocation2] sm:$0xff]
    %v44 = vld [vmem:[#allocation2 + $0x8] sm:$0xff]
    %v45 = vld [vmem:[%s0] sm:$0xff]
    %v46 = vld [vmem:[%s0 + $0x8] sm:$0xff]
    %v47 = vld [vmem:[%s0 + $0x10] sm:$0xff]
    %v48 = vld [vmem:[%s0 + $0x18] sm:$0xff]
    %v49 = vld [vmem:[%s0 + $0x20] sm:$0xff]
    %v50 = vld [vmem:[%s0 + $0x28] sm:$0xff]
    %v51 = vld [vmem:[%s0 + $0x30] sm:$0xff]
    %v52 = vld [vmem:[%s0 + $0x38] sm:$0xff]
    %v53 = vld [vmem:[%s0 + $0x40] sm:$0xff]
    %v54 = vld [vmem:[%s0 + $0x48] sm:$0xff]
    %v55 = vld [vmem:[%s0 + $0x50] sm:$0xff]
    %v56 = vld [vmem:[%s0 + $0x58] sm:$0xff]
    %v57 = vpack.c.bf16 %v51, %v45
    %v58 = vpack.c.bf16 %v52, %v46
    %v59 = vpack.c.bf16 %v53, %v47
    %v60 = vpack.c.bf16 %v54, %v48
    %v61 = vpack.c.bf16 %v55, %v49
    %v62 = vpack.c.bf16 %v56, %v50
    %v63 = vld [vmem:[#allocation4] sm:$0xf]
    %v64 = vld [vmem:[#allocation4 + $0x4] sm:$0xf]
    %v65 = vld [vmem:[#allocation4 + $0x8] sm:$0xf]
    %v66 = vld [vmem:[#allocation4 + $0xc] sm:$0xf]
    %v67 = vld [vmem:[#allocation4 + $0x10] sm:$0xf]
    %v68 = vld [vmem:[#allocation4 + $0x14] sm:$0xf]
    %v69 = vld [vmem:[#allocation4 + $0x18] sm:$0xf]
    %v70 = vld [vmem:[#allocation4 + $0x1c] sm:$0xf]
    %v71 = vld [vmem:[#allocation4 + $0x20] sm:$0xf]
    %v72 = vld [vmem:[#allocation4 + $0x24] sm:$0xf]
    %v73 = vld [vmem:[#allocation4 + $0x28] sm:$0xf]
    %v74 = vld [vmem:[#allocation4 + $0x2c] sm:$0xf]
    %v75 = vld [vmem:[#allocation4 + $0x30] sm:$0xf]
    %v76 = vld [vmem:[#allocation4 + $0x34] sm:$0xf]
    %v77 = vld [vmem:[#allocation4 + $0x38] sm:$0xf]
    %v78 = vld [vmem:[#allocation4 + $0x3c] sm:$0xf]
    %v79 = vld [vmem:[#allocation4 + $0x40] sm:$0xf]
    %v80 = vld [vmem:[#allocation4 + $0x44] sm:$0xf]
    %v81 = vld [vmem:[#allocation4 + $0x48] sm:$0xf]
    %v82 = vld [vmem:[#allocation4 + $0x4c] sm:$0xf]
    %v83 = vld [vmem:[#allocation4 + $0x50] sm:$0xf]
    %v84 = vld [vmem:[#allocation4 + $0x54] sm:$0xf]
    %v85 = vld [vmem:[#allocation4 + $0x58] sm:$0xf]
    %v86 = vld [vmem:[#allocation4 + $0x5c] sm:$0xf]
    %v87 = vld [vmem:[#allocation4 + $0x60] sm:$0xf]
    %v88 = vld [vmem:[#allocation4 + $0x64] sm:$0xf]
    %v89 = vld [vmem:[#allocation4 + $0x68] sm:$0xf]
    %v90 = vld [vmem:[#allocation4 + $0x6c] sm:$0xf]
    %v91 = vld [vmem:[#allocation4 + $0x70] sm:$0xf]
    %v92 = vld [vmem:[#allocation4 + $0x74] sm:$0xf]
    %v93 = vld [vmem:[#allocation4 + $0x78] sm:$0xf]
    %v94 = vld [vmem:[#allocation4 + $0x7c] sm:$0xf]
    %v95 = vld [vmem:[#allocation4 + $0x80] sm:$0xf]
    %v96 = vld [vmem:[#allocation4 + $0x84] sm:$0xf]
    %v97 = vld [vmem:[#allocation4 + $0x88] sm:$0xf]
    %v98 = vld [vmem:[#allocation4 + $0x8c] sm:$0xf]
    %v99 = vld [vmem:[#allocation4 + $0x90] sm:$0xf]
    %v100 = vld [vmem:[#allocation4 + $0x94] sm:$0xf]
    %v101 = vld [vmem:[#allocation4 + $0x98] sm:$0xf]
    %v102 = vld [vmem:[#allocation4 + $0x9c] sm:$0xf]
    %v103 = vld [vmem:[#allocation4 + $0xa0] sm:$0xf]
    %v104 = vld [vmem:[#allocation4 + $0xa4] sm:$0xf]
    %v105 = vld [vmem:[#allocation4 + $0xa8] sm:$0xf]
    %v106 = vld [vmem:[#allocation4 + $0xac] sm:$0xf]
    %v107 = vld [vmem:[#allocation4 + $0xb0] sm:$0xf]
    %v108 = vld [vmem:[#allocation4 + $0xb4] sm:$0xf]
    %v109 = vld [vmem:[#allocation4 + $0xb8] sm:$0xf]
    %v110 = vld [vmem:[#allocation4 + $0xbc] sm:$0xf]
    %v111 = vld [vmem:[#allocation4 + $0xc0] sm:$0xf]
    %v112 = vld [vmem:[#allocation4 + $0xc4] sm:$0xf]
    %v113 = vld [vmem:[#allocation4 + $0xc8] sm:$0xf]
    %v114 = vld [vmem:[#allocation4 + $0xcc] sm:$0xf]
    %v115 = vld [vmem:[#allocation4 + $0xd0] sm:$0xf]
    %v116 = vld [vmem:[#allocation4 + $0xd4] sm:$0xf]
    %v117 = vld [vmem:[#allocation4 + $0xd8] sm:$0xf]
    %v118 = vld [vmem:[#allocation4 + $0xdc] sm:$0xf]
    %v119 = vld [vmem:[#allocation4 + $0xe0] sm:$0xf]
    %v120 = vld [vmem:[#allocation4 + $0xe4] sm:$0xf]
    %v121 = vld [vmem:[#allocation4 + $0xe8] sm:$0xf]
    %v122 = vld [vmem:[#allocation4 + $0xec] sm:$0xf]
    %v123 = vld [vmem:[#allocation4 + $0xf0] sm:$0xf]
    %v124 = vld [vmem:[#allocation4 + $0xf4] sm:$0xf]
    %v125 = vld [vmem:[#allocation4 + $0xf8] sm:$0xf]
    %v126 = vld [vmem:[#allocation4 + $0xfc] sm:$0xf]
    %v127 = vld [vmem:[#allocation4 + $0x100] sm:$0xf]
    %v128 = vld [vmem:[#allocation4 + $0x104] sm:$0xf]
    %v129 = vld [vmem:[#allocation4 + $0x108] sm:$0xf]
    %v130 = vld [vmem:[#allocation4 + $0x10c] sm:$0xf]
    %v131 = vld [vmem:[#allocation4 + $0x110] sm:$0xf]
    %v132 = vld [vmem:[#allocation4 + $0x114] sm:$0xf]
    %v133 = vld [vmem:[#allocation4 + $0x118] sm:$0xf]
    %v134 = vld [vmem:[#allocation4 + $0x11c] sm:$0xf]
    %v135 = vld [vmem:[#allocation4 + $0x120] sm:$0xf]
    %v136 = vld [vmem:[#allocation4 + $0x124] sm:$0xf]
    %v137 = vld [vmem:[#allocation4 + $0x128] sm:$0xf]
    %v138 = vld [vmem:[#allocation4 + $0x12c] sm:$0xf]
    %v139 = vld [vmem:[#allocation4 + $0x130] sm:$0xf]
    %v140 = vld [vmem:[#allocation4 + $0x134] sm:$0xf]
    %v141 = vld [vmem:[#allocation4 + $0x138] sm:$0xf]
    %v142 = vld [vmem:[#allocation4 + $0x13c] sm:$0xf]
    %v143 = vld [vmem:[#allocation4 + $0x140] sm:$0xf]
    %v144 = vld [vmem:[#allocation4 + $0x144] sm:$0xf]
    %v145 = vld [vmem:[#allocation4 + $0x148] sm:$0xf]
    %v146 = vld [vmem:[#allocation4 + $0x14c] sm:$0xf]
    %v147 = vld [vmem:[#allocation4 + $0x150] sm:$0xf]
    %v148 = vld [vmem:[#allocation4 + $0x154] sm:$0xf]
    %v149 = vld [vmem:[#allocation4 + $0x158] sm:$0xf]
    %v150 = vld [vmem:[#allocation4 + $0x15c] sm:$0xf]
    %v151 = vld [vmem:[#allocation4 + $0x160] sm:$0xf]
    %v152 = vld [vmem:[#allocation4 + $0x164] sm:$0xf]
    %v153 = vld [vmem:[#allocation4 + $0x168] sm:$0xf]
    %v154 = vld [vmem:[#allocation4 + $0x16c] sm:$0xf]
    %v155 = vld [vmem:[#allocation4 + $0x170] sm:$0xf]
    %v156 = vld [vmem:[#allocation4 + $0x174] sm:$0xf]
    %v157 = vld [vmem:[#allocation4 + $0x178] sm:$0xf]
    %v158 = vld [vmem:[#allocation4 + $0x17c] sm:$0xf]
    %v255 = vunpack.c.l.b16 %v63
    %v256 = vunpack.c.l.b16 %v64
    %v257 = vunpack.c.l.b16 %v65
    %v258 = vunpack.c.l.b16 %v66
    %v259 = vunpack.c.l.b16 %v67
    %v260 = vunpack.c.l.b16 %v68
    %v261 = vunpack.c.l.b16 %v69
    %v262 = vunpack.c.l.b16 %v70
    %v263 = vunpack.c.l.b16 %v71
    %v264 = vunpack.c.l.b16 %v72
    %v265 = vunpack.c.l.b16 %v73
    %v266 = vunpack.c.l.b16 %v74
    %v267 = vunpack.c.l.b16 %v75
    %v268 = vunpack.c.l.b16 %v76
    %v269 = vunpack.c.l.b16 %v77
    %v270 = vunpack.c.l.b16 %v78
    %v271 = vunpack.c.l.b16 %v79
    %v272 = vunpack.c.l.b16 %v80
    %v273 = vunpack.c.l.b16 %v81
    %v274 = vunpack.c.l.b16 %v82
    %v275 = vunpack.c.l.b16 %v83
    %v276 = vunpack.c.l.b16 %v84
    %v277 = vunpack.c.l.b16 %v85
    %v278 = vunpack.c.l.b16 %v86
    %v279 = vunpack.c.l.b16 %v87
    %v280 = vunpack.c.l.b16 %v88
    %v281 = vunpack.c.l.b16 %v89
    %v282 = vunpack.c.l.b16 %v90
    %v283 = vunpack.c.l.b16 %v91
    %v284 = vunpack.c.l.b16 %v92
    %v285 = vunpack.c.l.b16 %v93
    %v286 = vunpack.c.l.b16 %v94
    %v287 = vunpack.c.l.b16 %v95
    %v288 = vunpack.c.l.b16 %v96
    %v289 = vunpack.c.l.b16 %v97
    %v290 = vunpack.c.l.b16 %v98
    %v291 = vunpack.c.l.b16 %v99
    %v292 = vunpack.c.l.b16 %v100
    %v293 = vunpack.c.l.b16 %v101
    %v294 = vunpack.c.l.b16 %v102
    %v295 = vunpack.c.l.b16 %v103
    %v296 = vunpack.c.l.b16 %v104
    %v297 = vunpack.c.l.b16 %v105
    %v298 = vunpack.c.l.b16 %v106
    %v299 = vunpack.c.l.b16 %v107
    %v300 = vunpack.c.l.b16 %v108
    %v301 = vunpack.c.l.b16 %v109
    %v302 = vunpack.c.l.b16 %v110
    %v303 = vunpack.c.l.b16 %v111
    %v304 = vunpack.c.l.b16 %v112
    %v305 = vunpack.c.l.b16 %v113
    %v306 = vunpack.c.l.b16 %v114
    %v307 = vunpack.c.l.b16 %v115
    %v308 = vunpack.c.l.b16 %v116
    %v309 = vunpack.c.l.b16 %v117
    %v310 = vunpack.c.l.b16 %v118
    %v311 = vunpack.c.l.b16 %v119
    %v312 = vunpack.c.l.b16 %v120
    %v313 = vunpack.c.l.b16 %v121
    %v314 = vunpack.c.l.b16 %v122
    %v315 = vunpack.c.l.b16 %v123
    %v316 = vunpack.c.l.b16 %v124
    %v317 = vunpack.c.l.b16 %v125
    %v318 = vunpack.c.l.b16 %v126
    %v319 = vunpack.c.l.b16 %v127
    %v320 = vunpack.c.l.b16 %v128
    %v321 = vunpack.c.l.b16 %v129
    %v322 = vunpack.c.l.b16 %v130
    %v323 = vunpack.c.l.b16 %v131
    %v324 = vunpack.c.l.b16 %v132
    %v325 = vunpack.c.l.b16 %v133
    %v326 = vunpack.c.l.b16 %v134
    %v327 = vunpack.c.l.b16 %v135
    %v328 = vunpack.c.l.b16 %v136
    %v329 = vunpack.c.l.b16 %v137
    %v330 = vunpack.c.l.b16 %v138
    %v331 = vunpack.c.l.b16 %v139
    %v332 = vunpack.c.l.b16 %v140
    %v333 = vunpack.c.l.b16 %v141
    %v334 = vunpack.c.l.b16 %v142
    %v335 = vunpack.c.l.b16 %v143
    %v336 = vunpack.c.l.b16 %v144
    %v337 = vunpack.c.l.b16 %v145
    %v338 = vunpack.c.l.b16 %v146
    %v339 = vunpack.c.l.b16 %v147
    %v340 = vunpack.c.l.b16 %v148
    %v341 = vunpack.c.l.b16 %v149
    %v342 = vunpack.c.l.b16 %v150
    %v343 = vunpack.c.l.b16 %v151
    %v344 = vunpack.c.l.b16 %v152
    %v345 = vunpack.c.l.b16 %v153
    %v346 = vunpack.c.l.b16 %v154
    %v347 = vunpack.c.l.b16 %v155
    %v348 = vunpack.c.l.b16 %v156
    %v349 = vunpack.c.l.b16 %v157
    %v350 = vunpack.c.l.b16 %v158
    %v351 = vpack.c.b16 %v256, %v255
    %v352 = vpack.c.b16 %v258, %v257
    %v353 = vpack.c.b16 %v260, %v259
    %v354 = vpack.c.b16 %v262, %v261
    %v355 = vpack.c.b16 %v264, %v263
    %v356 = vpack.c.b16 %v266, %v265
    %v357 = vpack.c.b16 %v268, %v267
    %v358 = vpack.c.b16 %v270, %v269
    %v359 = vpack.c.b16 %v272, %v271
    %v360 = vpack.c.b16 %v274, %v273
    %v361 = vpack.c.b16 %v276, %v275
    %v362 = vpack.c.b16 %v278, %v277
    %v363 = vpack.c.b16 %v280, %v279
    %v364 = vpack.c.b16 %v282, %v281
    %v365 = vpack.c.b16 %v284, %v283
    %v366 = vpack.c.b16 %v286, %v285
    %v367 = vpack.c.b16 %v288, %v287
    %v368 = vpack.c.b16 %v290, %v289
    %v369 = vpack.c.b16 %v292, %v291
    %v370 = vpack.c.b16 %v294, %v293
    %v371 = vpack.c.b16 %v296, %v295
    %v372 = vpack.c.b16 %v298, %v297
    %v373 = vpack.c.b16 %v300, %v299
    %v374 = vpack.c.b16 %v302, %v301
    %v375 = vpack.c.b16 %v304, %v303
    %v376 = vpack.c.b16 %v306, %v305
    %v377 = vpack.c.b16 %v308, %v307
    %v378 = vpack.c.b16 %v310, %v309
    %v379 = vpack.c.b16 %v312, %v311
    %v380 = vpack.c.b16 %v314, %v313
    %v381 = vpack.c.b16 %v316, %v315
    %v382 = vpack.c.b16 %v318, %v317
    %v383 = vpack.c.b16 %v320, %v319
    %v384 = vpack.c.b16 %v322, %v321
    %v385 = vpack.c.b16 %v324, %v323
    %v386 = vpack.c.b16 %v326, %v325
    %v387 = vpack.c.b16 %v328, %v327
    %v388 = vpack.c.b16 %v330, %v329
    %v389 = vpack.c.b16 %v332, %v331
    %v390 = vpack.c.b16 %v334, %v333
    %v391 = vpack.c.b16 %v336, %v335
    %v392 = vpack.c.b16 %v338, %v337
    %v393 = vpack.c.b16 %v340, %v339
    %v394 = vpack.c.b16 %v342, %v341
    %v395 = vpack.c.b16 %v344, %v343
    %v396 = vpack.c.b16 %v346, %v345
    %v397 = vpack.c.b16 %v348, %v347
    %v398 = vpack.c.b16 %v350, %v349
    %447 = vmatprep.subr.bf16.mxu0 0
    %448 = vmatpush1.bf16.msra.mxu0 %v351
    %449 = vmatprep.subr.bf16.mxu0 0
    %450 = vmatpush1.bf16.msra.mxu0 %v352
    %451 = vmatprep.subr.bf16.mxu0 0
    %452 = vmatpush1.bf16.msra.mxu0 %v353
    %453 = vmatprep.subr.bf16.mxu0 0
    %454 = vmatpush1.bf16.msra.mxu0 %v354
    %455 = vmatprep.subr.bf16.mxu0 0
    %456 = vmatpush1.bf16.msra.mxu0 %v355
    %457 = vmatprep.subr.bf16.mxu0 0
    %458 = vmatpush1.bf16.msra.mxu0 %v356
    %459 = vmatprep.subr.bf16.mxu0 0
    %460 = vmatpush1.bf16.msra.mxu0 %v357
    %461 = vmatprep.subr.bf16.mxu0 0
    %462 = vmatpush1.bf16.msra.mxu0 %v358
    %463 = vmatprep.subr.bf16.mxu0 0
    %464 = vmatpush1.bf16.msra.mxu0 %v359
    %465 = vmatprep.subr.bf16.mxu0 0
    %466 = vmatpush1.bf16.msra.mxu0 %v360
    %467 = vmatprep.subr.bf16.mxu0 0
    %468 = vmatpush1.bf16.msra.mxu0 %v361
    %469 = vmatprep.subr.bf16.mxu0 0
    %470 = vmatpush1.bf16.msra.mxu0 %v362
    %471 = vmatprep.subr.bf16.mxu0 0
    %472 = vmatpush1.bf16.msra.mxu0 %v363
    %473 = vmatprep.subr.bf16.mxu0 0
    %474 = vmatpush1.bf16.msra.mxu0 %v364
    %475 = vmatprep.subr.bf16.mxu0 0
    %476 = vmatpush1.bf16.msra.mxu0 %v365
    %477 = vmatprep.subr.bf16.mxu0 0
    %478 = vmatpush1.bf16.msra.mxu0 %v366
    %479 = vmatprep.mubr.bf16.mxu0 %v58
    %480 = vmatmul.mubr.bf16.gmra.mrb[0].mxu0 %v57
    %v481 = vpop.f32.mrb[0].mxu0
    %v482 = vadd.f32 0.0, %v481
    %v483 = vpop.f32.mrb[0].mxu0
    %v484 = vpop.f32.mrb[0].mxu0
    %v485 = vadd.f32 0.0, %v484
    %v486 = vpop.f32.mrb[0].mxu0
    %487 = vdwg.mxu0
    %488 = vmatprep.subr.bf16.mxu0 0
    %489 = vmatpush1.bf16.msra.mxu0 %v367
    %490 = vmatprep.subr.bf16.mxu0 0
    %491 = vmatpush1.bf16.msra.mxu0 %v368
    %492 = vmatprep.subr.bf16.mxu0 0
    %493 = vmatpush1.bf16.msra.mxu0 %v369
    %494 = vmatprep.subr.bf16.mxu0 0
    %495 = vmatpush1.bf16.msra.mxu0 %v370
    %496 = vmatprep.subr.bf16.mxu0 0
    %497 = vmatpush1.bf16.msra.mxu0 %v371
    %498 = vmatprep.subr.bf16.mxu0 0
    %499 = vmatpush1.bf16.msra.mxu0 %v372
    %500 = vmatprep.subr.bf16.mxu0 0
    %501 = vmatpush1.bf16.msra.mxu0 %v373
    %502 = vmatprep.subr.bf16.mxu0 0
    %503 = vmatpush1.bf16.msra.mxu0 %v374
    %504 = vmatprep.subr.bf16.mxu0 0
    %505 = vmatpush1.bf16.msra.mxu0 %v375
    %506 = vmatprep.subr.bf16.mxu0 0
    %507 = vmatpush1.bf16.msra.mxu0 %v376
    %508 = vmatprep.subr.bf16.mxu0 0
    %509 = vmatpush1.bf16.msra.mxu0 %v377
    %510 = vmatprep.subr.bf16.mxu0 0
    %511 = vmatpush1.bf16.msra.mxu0 %v378
    %512 = vmatprep.subr.bf16.mxu0 0
    %513 = vmatpush1.bf16.msra.mxu0 %v379
    %514 = vmatprep.subr.bf16.mxu0 0
    %515 = vmatpush1.bf16.msra.mxu0 %v380
    %516 = vmatprep.subr.bf16.mxu0 0
    %517 = vmatpush1.bf16.msra.mxu0 %v381
    %518 = vmatprep.subr.bf16.mxu0 0
    %519 = vmatpush1.bf16.msra.mxu0 %v382
    %520 = vmatprep.mubr.bf16.mxu0 %v60
    %521 = vmatmul.mubr.bf16.gmra.mrb[0].mxu0 %v59
    %v522 = vpop.f32.mrb[0].mxu0
    %v523 = vadd.f32 %v482, %v522
    %v524 = vpop.f32.mrb[0].mxu0
    %v525 = vpop.f32.mrb[0].mxu0
    %v526 = vadd.f32 %v485, %v525
    %v527 = vpop.f32.mrb[0].mxu0
    %528 = vdwg.mxu0
    %529 = vmatprep.subr.bf16.mxu0 0
    %530 = vmatpush1.bf16.msra.mxu0 %v383
    %531 = vmatprep.subr.bf16.mxu0 0
    %532 = vmatpush1.bf16.msra.mxu0 %v384
    %533 = vmatprep.subr.bf16.mxu0 0
    %534 = vmatpush1.bf16.msra.mxu0 %v385
    %535 = vmatprep.subr.bf16.mxu0 0
    %536 = vmatpush1.bf16.msra.mxu0 %v386
    %537 = vmatprep.subr.bf16.mxu0 0
    %538 = vmatpush1.bf16.msra.mxu0 %v387
    %539 = vmatprep.subr.bf16.mxu0 0
    %540 = vmatpush1.bf16.msra.mxu0 %v388
    %541 = vmatprep.subr.bf16.mxu0 0
    %542 = vmatpush1.bf16.msra.mxu0 %v389
    %543 = vmatprep.subr.bf16.mxu0 0
    %544 = vmatpush1.bf16.msra.mxu0 %v390
    %545 = vmatprep.subr.bf16.mxu0 0
    %546 = vmatpush1.bf16.msra.mxu0 %v391
    %547 = vmatprep.subr.bf16.mxu0 0
    %548 = vmatpush1.bf16.msra.mxu0 %v392
    %549 = vmatprep.subr.bf16.mxu0 0
    %550 = vmatpush1.bf16.msra.mxu0 %v393
    %551 = vmatprep.subr.bf16.mxu0 0
    %552 = vmatpush1.bf16.msra.mxu0 %v394
    %553 = vmatprep.subr.bf16.mxu0 0
    %554 = vmatpush1.bf16.msra.mxu0 %v395
    %555 = vmatprep.subr.bf16.mxu0 0
    %556 = vmatpush1.bf16.msra.mxu0 %v396
    %557 = vmatprep.subr.bf16.mxu0 0
    %558 = vmatpush1.bf16.msra.mxu0 %v397
    %559 = vmatprep.subr.bf16.mxu0 0
    %560 = vmatpush1.bf16.msra.mxu0 %v398
    %561 = vmatprep.mubr.bf16.mxu0 %v62
    %562 = vmatmul.mubr.bf16.gmra.mrb[0].mxu0 %v61
    %v563 = vpop.f32.mrb[0].mxu0
    %v564 = vadd.f32 %v523, %v563
    %v565 = vpop.f32.mrb[0].mxu0
    %v566 = vpop.f32.mrb[0].mxu0
    %v567 = vadd.f32 %v526, %v566
    %v568 = vpop.f32.mrb[0].mxu0
    %569 = vdwg.mxu0
    %v570 = vadd.f32 %v43, %v564
    %v571 = vadd.f32 %v44, %v567
    %572 = vst [vmem:[#allocation2] sm:$0xff] %v570
    %573 = vst [vmem:[#allocation2 + $0x8] sm:$0xff] %v571
    // Predicated region
    $region30: #{discriminator_forward.1} parent=1 // pred_check
      %p574 = pneg %p37
    $region31: #{discriminator_forward.1} parent=1 // pred_check_branch
      %576 = sbr.rel (%p574) target = $region33
    $region32: #{discriminator_forward.1} parent=1 // pred_region
      %v577 = vld [vmem:[#allocation2] sm:$0xff]
      %v578 = vld [vmem:[#allocation2 + $0x8] sm:$0xff]
      %v579 = vld [vmem:[%s2] sm:$0x1]
      %v581 = vlaneseq
      %v582 = vshrl.u32 %v581, 7
      %v583 = vsub.s32 0, %v582
      %v584 = vrot.slane %v579, %v583
      %v586 = vadd.f32 %v577, %v584
      %v587 = vadd.f32 %v578, %v584
      %vm588 = vcmp.ge.f32.partialorder %v586, 0.0
      %vm589 = vcmp.ge.f32.partialorder %v587, 0.0
      %v590 = vmul.f32 %v586, 0.1
      %v591 = vmul.f32 %v587, 0.1
      %v592 = vsel %vm588, %v586, %v590
      %v593 = vsel %vm589, %v587, %v591
      %v594 = vld [vmem:[%s3] sm:$0x1]
      %v596 = vlaneseq
      %v597 = vshrl.u32 %v596, 7
      %v598 = vsub.s32 0, %v597
      %v599 = vrot.slane %v594, %v598
      %v601 = vmul.f32 %v592, %v599
      %v602 = vmul.f32 %v593, %v599
      %603 = vadd.xlane.f32.xlu0 %v601
      %v604 = vpop.xlane.xlu0 %603
      %605 = vadd.xlane.f32.xlu0 %v602
      %v606 = vpop.xlane.xlu0 %605
      %v607 = vld [vmem:[#allocation3] sm:$0x1]
      %v609 = vlaneseq
      %v610 = vshrl.u32 %v609, 7
      %v611 = vsub.s32 0, %v610
      %v612 = vrot.slane %v607, %v611
      %v614 = vadd.f32 %v604, %v612
      %v615 = vadd.f32 %v606, %v612
      %v616 = vxor.u32 %v614, 2147483648
      %v617 = vxor.u32 %v615, 2147483648
      %v618 = vmul.f32 %v616, 1.442695
      %v619 = vpow.pop %v618
      %v620 = vmul.f32 %v617, 1.442695
      %v621 = vpow.pop %v620
      %v622 = vadd.f32 %v619, 1.0
      %v623 = vadd.f32 %v621, 1.0
      %v624 = vrcp.pop %v622
      %v625 = vmul.f32 1.0, %v624
      %v626 = vrcp.pop %v623
      %v627 = vmul.f32 1.0, %v626
      %vm628 = vcmask 7168
      %629 = vst.msk [vmem:[%s5] sm:$0xff] %vm628, %v625
      %630 = vst.msk [vmem:[%s5 + $0x8] sm:$0xff] %vm628, %v627
    $region33: #{discriminator_forward.1} parent=1 // pred_fallthru
      _
    // Predicated region
    $region34: #{discriminator_forward.1} parent=1 // pred_check
      _
    $region35: #{discriminator_forward.1} parent=1 // pred_check_branch
      %632 = sbr.rel (0) target = $region37
    $region36: #{discriminator_forward.1} parent=1 // pred_region
      _
    $region37: #{discriminator_forward.1} parent=1 // pred_fallthru
      _
    // Predicated region
    $region38: #{discriminator_forward.1} parent=1 // pred_check
      _
    $region39: #{discriminator_forward.1} parent=1 // pred_check_branch
      %634 = sbr.rel (0) target = $region41
    $region40: #{discriminator_forward.1} parent=1 // pred_region
      _
    $region41: #{discriminator_forward.1} parent=1 // pred_fallthru
      _
    %635 = vsyncpa [#allocation5], 1

</llo_original>
